<compile_context>
chip_gen: v7x
topology: tpu7x:2x2x1
jax: 0.10.0
libtpu: 0.0.40
codegen_flags: <defaults>
</compile_context>

<pallas_src>
import functools

import jax
import jax.numpy as jnp
from jax import lax
from jax.experimental import pallas as pl
from jax.experimental.pallas import tpu as pltpu


def _round_up(n, m):
    return ((n + m - 1) // m) * m


def _cdiv(n, m):
    return (n + m - 1) // m


def _mlp_kernel(x_ref, w1_ref, b1_ref, w2_ref, b2_ref, w3_ref, b3_ref, o_ref,
                *, chunk):
    """One batch tile: (fc1 + relu) -> (fc2 + relu) -> fc3, in row sub-chunks."""
    tb = x_ref.shape[0]

    def body(r0, rows):
        xs = x_ref[pl.ds(r0, rows), :]
        # fc1 + relu   (bf16 operands, f32 accumulation on the MXU)
        h1 = jnp.dot(xs, w1_ref[...], preferred_element_type=jnp.float32)
        h1 = jnp.maximum(h1 + b1_ref[...], 0.0)
        # fc2 + relu
        h2 = jnp.dot(h1.astype(jnp.bfloat16), w2_ref[...],
                     preferred_element_type=jnp.float32)
        h2 = jnp.maximum(h2 + b2_ref[...], 0.0)
        # fc3 (no activation)
        h3 = jnp.dot(h2.astype(jnp.bfloat16), w3_ref[...],
                     preferred_element_type=jnp.float32)
        o_ref[pl.ds(r0, rows), :] = (h3 + b3_ref[...]).astype(o_ref.dtype)

    if tb <= chunk:
        body(0, tb)
        return

    n_full = tb // chunk
    rem = tb - n_full * chunk

    def loop_body(c, carry):
        body(pl.multiple_of(c * chunk, chunk), chunk)
        return carry

    lax.fori_loop(0, n_full, loop_body, 0, unroll=True)
    if rem:
        body(n_full * chunk, rem)   # trailing partial chunk (multiple of 8 rows)


def net_adult_forward(x, params, *, max_tile=2048, inner_chunk=512, min_steps=2):
    """x: [B, 108] float32. params: dict of w1,b1,w2,b2,w3,b3 (f32, [in,out])."""
    B, f_in = x.shape
    assert f_in == 108

    # bf16 for the streamed input and the (tiny, resident) weights; biases f32.
    w1 = params["w1"].astype(jnp.bfloat16)
    w2 = params["w2"].astype(jnp.bfloat16)
    w3 = params["w3"].astype(jnp.bfloat16)
    b1, b2, b3 = params["b1"], params["b2"], params["b3"]
    d1, d2, d3 = w1.shape[1], w2.shape[1], w3.shape[1]

    # --- Batch-tile selection ------------------------------------------------
    # Target a small, even number of grid steps (>=2 so the "parallel" axis
    # actually uses both v7x TensorCores), capped at `max_tile` rows per step,
    # and size the tile from the real B so padding waste stays ~1/n_steps.
    if B <= 8:
        n_steps = 1
    else:
        n_steps = max(min_steps, _cdiv(B, max_tile))
        if n_steps % 2:
            n_steps += 1          # even step count -> clean 2-TC split on v7x
    tb = _round_up(_cdiv(B, n_steps), 8)    # sublane-aligned batch tile
    bp = _round_up(B, tb)
    n_tiles = bp // tb

    xb = x.astype(jnp.bfloat16)
    if bp != B:
        xb = jnp.pad(xb, ((0, bp - B), (0, 0)))

    flops = 2 * bp * (f_in * d1 + d1 * d2 + d2 * d3)
    bytes_accessed = (bp * f_in * 2                          # x (bf16, streamed)
                      + bp * d3 * 2                          # output (bf16)
                      + (f_in * d1 + d1 * d2 + d2 * d3) * 2  # weights (bf16)
                      + (d1 + d2 + d3) * 4)                  # biases (f32)

    def resident(a):
        # Full-array block, same block index every grid step -> stays in VMEM.
        return pl.BlockSpec(a.shape, lambda i: (0,) * a.ndim)

    kernel = functools.partial(_mlp_kernel, chunk=min(inner_chunk, tb))

    out = pl.pallas_call(
        kernel,
        out_shape=jax.ShapeDtypeStruct((bp, d3), jnp.bfloat16),
        grid=(n_tiles,),
        in_specs=[
            pl.BlockSpec((tb, f_in), lambda i: (i, 0)),   # x: streamed per tile
            resident(w1), resident(b1),
            resident(w2), resident(b2),
            resident(w3), resident(b3),
        ],
        out_specs=pl.BlockSpec((tb, d3), lambda i: (i, 0)),
        compiler_params=pltpu.CompilerParams(
            dimension_semantics=("parallel",),
            # Explicit limit: raises v5e's 16 MiB default, stays <= v7x physical.
            vmem_limit_bytes=32 * 1024 * 1024),
        cost_estimate=pl.CostEstimate(
            flops=flops, transcendentals=0, bytes_accessed=bytes_accessed),
    )(xb, w1, b1, w2, b2, w3, b3)

    # Pad rows hold relu(b)-derived garbage; slice them off before returning.
    return out[:B].astype(jnp.float32)


def init_params(key):
    """Deterministic init mimicking nn.Linear default U(-1/sqrt(fan_in), ..)."""
    def linear(key, fan_in, fan_out):
        kw, kb = jax.random.split(key)
        bound = 1.0 / (fan_in ** 0.5)
        w = jax.random.uniform(kw, (fan_in, fan_out), jnp.float32, -bound, bound)
        b = jax.random.uniform(kb, (1, fan_out), jnp.float32, -bound, bound)
        return w, b

    k1, k2, k3 = jax.random.split(key, 3)
    w1, b1 = linear(k1, 108, 50)
    w2, b2 = linear(k2, 50, 10)
    w3, b3 = linear(k3, 10, 2)
    return dict(w1=w1, b1=b1, w2=w2, b2=b2, w3=w3, b3=b3)


def reference_forward_bf16(x, p):
    """Pure-JAX reference using the same bf16-in / f32-accumulate recipe."""
    bf, f32 = jnp.bfloat16, jnp.float32
    h1 = jnp.maximum(
        jnp.dot(x.astype(bf), p["w1"].astype(bf), preferred_element_type=f32)
        + p["b1"], 0.0)
    h2 = jnp.maximum(
        jnp.dot(h1.astype(bf), p["w2"].astype(bf), preferred_element_type=f32)
        + p["b2"], 0.0)
    h3 = (jnp.dot(h2.astype(bf), p["w3"].astype(bf), preferred_element_type=f32)
          + p["b3"])
    return h3.astype(bf).astype(f32)


def reference_forward_f32(x, p):
    """Pure-f32 reference matching the original PyTorch module exactly."""
    h1 = jnp.maximum(x @ p["w1"] + p["b1"], 0.0)
    h2 = jnp.maximum(h1 @ p["w2"] + p["b2"], 0.0)
    return h2 @ p["w3"] + p["b3"]


if __name__ == "__main__":
    key = jax.random.PRNGKey(0)
    kp, kx = jax.random.split(key)
    params = init_params(kp)

    # Small single-tile check (B <= 8 path).
    batch = 8
    x = jax.random.normal(kx, (batch, 108), jnp.float32)
    out = jax.block_until_ready(net_adult_forward(x, params))
    assert out.shape == (batch, 2)
    assert jnp.allclose(out, reference_forward_bf16(x, params), atol=3e-2, rtol=3e-2)
    # Sanity vs. the true f32 model (deviation is just bf16 quantization).
    assert jnp.allclose(out, reference_forward_f32(x, params), atol=1e-1, rtol=1e-1)

    # Multi-tile check: B not a multiple of the tile, exercises the even-step
    # tile selection, the inner chunk loop + trailing partial chunk, and the
    # padded-batch slice-off.
    batch2 = 300
    x2 = jax.random.normal(jax.random.fold_in(kx, 1), (batch2, 108), jnp.float32)
    out2 = jax.block_until_ready(
        net_adult_forward(x2, params, max_tile=128, inner_chunk=64))
    assert out2.shape == (batch2, 2)
    assert jnp.allclose(out2, reference_forward_bf16(x2, params), atol=3e-2, rtol=3e-2)

    print("KERNEL_OK")
</pallas_src>

<mosaic_0001>
module attributes {stable_mosaic.version = 11 : i64} {
  func.func @_mlp_kernel(%arg0: i32, %arg1: memref<8x108xbf16, #tpu.memory_space<vmem>>, %arg2: memref<108x50xbf16, #tpu.memory_space<vmem>>, %arg3: memref<1x50xf32, #tpu.memory_space<vmem>>, %arg4: memref<50x10xbf16, #tpu.memory_space<vmem>>, %arg5: memref<1x10xf32, #tpu.memory_space<vmem>>, %arg6: memref<10x2xbf16, #tpu.memory_space<vmem>>, %arg7: memref<1x2xf32, #tpu.memory_space<vmem>>, %arg8: memref<8x2xbf16, #tpu.memory_space<vmem>>) attributes {dimension_semantics = [#tpu.dimension_semantics<parallel>], iteration_bounds = array<i64: 1>, scalar_prefetch = 0 : i64, scratch_operands = 0 : i64, tpu.core_type = #tpu.core_type<tc>, window_params = [{transform_indices = @transform_0, window_bounds = array<i64: 8, 108>}, {pipeline_mode = #tpu.pipeline_mode<synchronous>, transform_indices = @transform_1, window_bounds = array<i64: 108, 50>}, {pipeline_mode = #tpu.pipeline_mode<synchronous>, transform_indices = @transform_2, window_bounds = array<i64: 1, 50>}, {pipeline_mode = #tpu.pipeline_mode<synchronous>, transform_indices = @transform_3, window_bounds = array<i64: 50, 10>}, {pipeline_mode = #tpu.pipeline_mode<synchronous>, transform_indices = @transform_4, window_bounds = array<i64: 1, 10>}, {pipeline_mode = #tpu.pipeline_mode<synchronous>, transform_indices = @transform_5, window_bounds = array<i64: 10, 2>}, {pipeline_mode = #tpu.pipeline_mode<synchronous>, transform_indices = @transform_6, window_bounds = array<i64: 1, 2>}, {transform_indices = @transform_7, window_bounds = array<i64: 8, 2>}]} {
    %c0 = arith.constant 0 : index
    %c0_0 = arith.constant 0 : index
    %0 = vector.load %arg1[%c0, %c0_0] : memref<8x108xbf16, #tpu.memory_space<vmem>>, vector<8x108xbf16>
    %c0_1 = arith.constant 0 : index
    %c0_2 = arith.constant 0 : index
    %1 = vector.load %arg2[%c0_1, %c0_2] : memref<108x50xbf16, #tpu.memory_space<vmem>>, vector<108x50xbf16>
    %cst = arith.constant dense<0.000000e+00> : vector<8x50xf32>
    %2 = tpu.matmul %0, %1, %cst {dimension_numbers = #tpu.dot_dimension_numbers<[1], [0], [0], [1], [0, 0, 1, 1], [], []>} : vector<8x108xbf16>, vector<108x50xbf16>, vector<8x50xf32> -> vector<8x50xf32>
    %c0_3 = arith.constant 0 : index
    %c0_4 = arith.constant 0 : index
    %3 = vector.load %arg3[%c0_3, %c0_4] : memref<1x50xf32, #tpu.memory_space<vmem>>, vector<1x50xf32>
    %4 = vector.broadcast %3 : vector<1x50xf32> to vector<8x50xf32>
    %5 = arith.addf %2, %4 : vector<8x50xf32>
    %cst_5 = arith.constant 0.000000e+00 : f32
    %6 = vector.broadcast %cst_5 : f32 to vector<8x50xf32>
    %7 = arith.maximumf %5, %6 : vector<8x50xf32>
    %8 = arith.truncf %7 : vector<8x50xf32> to vector<8x50xbf16>
    %c0_6 = arith.constant 0 : index
    %c0_7 = arith.constant 0 : index
    %9 = vector.load %arg4[%c0_6, %c0_7] : memref<50x10xbf16, #tpu.memory_space<vmem>>, vector<50x10xbf16>
    %cst_8 = arith.constant dense<0.000000e+00> : vector<8x10xf32>
    %10 = tpu.matmul %8, %9, %cst_8 {dimension_numbers = #tpu.dot_dimension_numbers<[1], [0], [0], [1], [0, 0, 1, 1], [], []>} : vector<8x50xbf16>, vector<50x10xbf16>, vector<8x10xf32> -> vector<8x10xf32>
    %c0_9 = arith.constant 0 : index
    %c0_10 = arith.constant 0 : index
    %11 = vector.load %arg5[%c0_9, %c0_10] : memref<1x10xf32, #tpu.memory_space<vmem>>, vector<1x10xf32>
    %12 = vector.broadcast %11 : vector<1x10xf32> to vector<8x10xf32>
    %13 = arith.addf %10, %12 : vector<8x10xf32>
    %cst_11 = arith.constant 0.000000e+00 : f32
    %14 = vector.broadcast %cst_11 : f32 to vector<8x10xf32>
    %15 = arith.maximumf %13, %14 : vector<8x10xf32>
    %16 = arith.truncf %15 : vector<8x10xf32> to vector<8x10xbf16>
    %c0_12 = arith.constant 0 : index
    %c0_13 = arith.constant 0 : index
    %17 = vector.load %arg6[%c0_12, %c0_13] : memref<10x2xbf16, #tpu.memory_space<vmem>>, vector<10x2xbf16>
    %cst_14 = arith.constant dense<0.000000e+00> : vector<8x2xf32>
    %18 = tpu.matmul %16, %17, %cst_14 {dimension_numbers = #tpu.dot_dimension_numbers<[1], [0], [0], [1], [0, 0, 1, 1], [], []>} : vector<8x10xbf16>, vector<10x2xbf16>, vector<8x2xf32> -> vector<8x2xf32>
    %c0_15 = arith.constant 0 : index
    %c0_16 = arith.constant 0 : index
    %19 = vector.load %arg7[%c0_15, %c0_16] : memref<1x2xf32, #tpu.memory_space<vmem>>, vector<1x2xf32>
    %20 = vector.broadcast %19 : vector<1x2xf32> to vector<8x2xf32>
    %21 = arith.addf %18, %20 : vector<8x2xf32>
    %22 = arith.truncf %21 : vector<8x2xf32> to vector<8x2xbf16>
    %c0_17 = arith.constant 0 : index
    %c0_18 = arith.constant 0 : index
    %23 = vector.load %arg8[%c0_17, %c0_18] : memref<8x2xbf16, #tpu.memory_space<vmem>>, vector<8x2xbf16>
    tpu.vector_store %arg8[%c0_17, %c0_18], %22 {strides = array<i32>} : memref<8x2xbf16, #tpu.memory_space<vmem>>, vector<8x2xbf16>,
    return
  }
  func.func @transform_0(%arg0: i32) -> (i32, i32) {
    %c0_i32 = arith.constant 0 : i32
    %c0_i32_0 = arith.constant 0 : i32
    return %arg0, %c0_i32 : i32, i32
  }
  func.func @transform_1(%arg0: i32) -> (i32, i32) {
    %c0_i32 = arith.constant 0 : i32
    %c0_i32_0 = arith.constant 0 : i32
    %c0_i32_1 = arith.constant 0 : i32
    return %c0_i32, %c0_i32_0 : i32, i32
  }
  func.func @transform_2(%arg0: i32) -> (i32, i32) {
    %c0_i32 = arith.constant 0 : i32
    %c0_i32_0 = arith.constant 0 : i32
    %c0_i32_1 = arith.constant 0 : i32
    return %c0_i32, %c0_i32_0 : i32, i32
  }
  func.func @transform_3(%arg0: i32) -> (i32, i32) {
    %c0_i32 = arith.constant 0 : i32
    %c0_i32_0 = arith.constant 0 : i32
    %c0_i32_1 = arith.constant 0 : i32
    return %c0_i32, %c0_i32_0 : i32, i32
  }
  func.func @transform_4(%arg0: i32) -> (i32, i32) {
    %c0_i32 = arith.constant 0 : i32
    %c0_i32_0 = arith.constant 0 : i32
    %c0_i32_1 = arith.constant 0 : i32
    return %c0_i32, %c0_i32_0 : i32, i32
  }
  func.func @transform_5(%arg0: i32) -> (i32, i32) {
    %c0_i32 = arith.constant 0 : i32
    %c0_i32_0 = arith.constant 0 : i32
    %c0_i32_1 = arith.constant 0 : i32
    return %c0_i32, %c0_i32_0 : i32, i32
  }
  func.func @transform_6(%arg0: i32) -> (i32, i32) {
    %c0_i32 = arith.constant 0 : i32
    %c0_i32_0 = arith.constant 0 : i32
    %c0_i32_1 = arith.constant 0 : i32
    return %c0_i32, %c0_i32_0 : i32, i32
  }
  func.func @transform_7(%arg0: i32) -> (i32, i32) {
    %c0_i32 = arith.constant 0 : i32
    %c0_i32_0 = arith.constant 0 : i32
    return %arg0, %c0_i32 : i32, i32
  }
}

</mosaic_0001>

<llo_original>
// kernel: tpu_custom_call.1
$region0: #{tpu_custom_call.1}
  #allocation0 [shape = 'u32[]', space=smem, size = 0x4, offset = 0x4, fixed_abs, tag = 'smem constant byte address 0x4 - core index']
  #allocation1 [shape = 'u32[144,128]{1,0:T(1,128)}', space=vmem, size = 0x12000, scoped, tag = 'internal scratch']
  %s0 = inlined_call_operand.vmem [shape: bf16[8,108], index: 0, kind: input, shape index: {}]
  %s1 = inlined_call_operand.vmem [shape: bf16[108,50], index: 1, kind: input, shape index: {}]
  %s2 = inlined_call_operand.vmem [shape: f32[1,50], index: 2, kind: input, shape index: {}]
  %s3 = inlined_call_operand.vmem [shape: bf16[50,10], index: 3, kind: input, shape index: {}]
  %s4 = inlined_call_operand.vmem [shape: f32[1,10], index: 4, kind: input, shape index: {}]
  %s5 = inlined_call_operand.vmem [shape: bf16[10,2], index: 5, kind: input, shape index: {}]
  %s6 = inlined_call_operand.vmem [shape: f32[1,2], index: 6, kind: input, shape index: {}]
  %s7 = inlined_call_operand.vmem [shape: bf16[8,2], index: 7, kind: output, shape index: {}]
  %s8 = sld [smem:[#allocation0]]
  $region38: #{tpu_custom_call.1} parent=0
    _
  %s10 = ssub.s32 1, %s8
  %s11 = scalar_select 0, %s10, %s8
  // Predicated region
  $region2: #{tpu_custom_call.1} parent=0 // pred_check
    _
  $region3: #{tpu_custom_call.1} parent=0 // pred_check_branch
    %13 = sbr.rel (0) target = $region5
  $region4: #{tpu_custom_call.1} parent=0 // pred_region
    _
  $region5: #{tpu_custom_call.1} parent=0 // pred_fallthru
    _
  // Predicated region
  $region6: #{tpu_custom_call.1} parent=0 // pred_check
    _
  $region7: #{tpu_custom_call.1} parent=0 // pred_check_branch
    %15 = sbr.rel (0) target = $region9
  $region8: #{tpu_custom_call.1} parent=0 // pred_region
    _
  $region9: #{tpu_custom_call.1} parent=0 // pred_fallthru
    _
  // Predicated region
  $region10: #{tpu_custom_call.1} parent=0 // pred_check
    _
  $region11: #{tpu_custom_call.1} parent=0 // pred_check_branch
    %17 = sbr.rel (0) target = $region13
  $region12: #{tpu_custom_call.1} parent=0 // pred_region
    _
  $region13: #{tpu_custom_call.1} parent=0 // pred_fallthru
    _
  // Predicated region
  $region14: #{tpu_custom_call.1} parent=0 // pred_check
    _
  $region15: #{tpu_custom_call.1} parent=0 // pred_check_branch
    %19 = sbr.rel (0) target = $region17
  $region16: #{tpu_custom_call.1} parent=0 // pred_region
    _
  $region17: #{tpu_custom_call.1} parent=0 // pred_fallthru
    _
  // Predicated region
  $region18: #{tpu_custom_call.1} parent=0 // pred_check
    _
  $region19: #{tpu_custom_call.1} parent=0 // pred_check_branch
    %21 = sbr.rel (0) target = $region21
  $region20: #{tpu_custom_call.1} parent=0 // pred_region
    _
  $region21: #{tpu_custom_call.1} parent=0 // pred_fallthru
    _
  // Predicated region
  $region22: #{tpu_custom_call.1} parent=0 // pred_check
    _
  $region23: #{tpu_custom_call.1} parent=0 // pred_check_branch
    %23 = sbr.rel (0) target = $region25
  $region24: #{tpu_custom_call.1} parent=0 // pred_region
    _
  $region25: #{tpu_custom_call.1} parent=0 // pred_fallthru
    _
  // Predicated region
  $region26: #{tpu_custom_call.1} parent=0 // pred_check
    _
  $region27: #{tpu_custom_call.1} parent=0 // pred_check_branch
    %25 = sbr.rel (0) target = $region29
  $region28: #{tpu_custom_call.1} parent=0 // pred_region
    _
  $region29: #{tpu_custom_call.1} parent=0 // pred_fallthru
    _
  %v27 = vld [vmem:[%s0] sm:$0xf]
  %v28 = vld [vmem:[%s1] sm:$0xf]
  %v29 = vld [vmem:[%s1 + $0x4] sm:$0xf]
  %v30 = vld [vmem:[%s1 + $0x8] sm:$0xf]
  %v31 = vld [vmem:[%s1 + $0xc] sm:$0xf]
  %v32 = vld [vmem:[%s1 + $0x10] sm:$0xf]
  %v33 = vld [vmem:[%s1 + $0x14] sm:$0xf]
  %v34 = vld [vmem:[%s1 + $0x18] sm:$0xf]
  %v35 = vld [vmem:[%s1 + $0x1c] sm:$0xf]
  %v36 = vld [vmem:[%s1 + $0x20] sm:$0xf]
  %v37 = vld [vmem:[%s1 + $0x24] sm:$0xf]
  %v38 = vld [vmem:[%s1 + $0x28] sm:$0xf]
  %v39 = vld [vmem:[%s1 + $0x2c] sm:$0xf]
  %v40 = vld [vmem:[%s1 + $0x30] sm:$0xf]
  %v41 = vld [vmem:[%s1 + $0x34] sm:$0x3]
  %v42 = vld [vmem:[%s2] sm:$0x1]
  %v44 = vlaneseq
  %v45 = vshrl.u32 %v44, 7
  %v46 = vsub.s32 0, %v45
  %v47 = vrot.slane %v42, %v46
  %v63 = vunpack.c.l.b16 %v28
  %v64 = vunpack.c.l.b16 %v29
  %v65 = vunpack.c.l.b16 %v30
  %v66 = vunpack.c.l.b16 %v31
  %v67 = vunpack.c.l.b16 %v32
  %v68 = vunpack.c.l.b16 %v33
  %v69 = vunpack.c.l.b16 %v34
  %v70 = vunpack.c.l.b16 %v35
  %v71 = vunpack.c.l.b16 %v36
  %v72 = vunpack.c.l.b16 %v37
  %v73 = vunpack.c.l.b16 %v38
  %v74 = vunpack.c.l.b16 %v39
  %v75 = vunpack.c.l.b16 %v40
  %v76 = vunpack.c.l.b16 %v41
  %v77 = vpack.c.b16 %v64, %v63
  %v78 = vpack.c.b16 %v66, %v65
  %v79 = vpack.c.b16 %v68, %v67
  %v80 = vpack.c.b16 %v70, %v69
  %v81 = vpack.c.b16 %v72, %v71
  %v82 = vpack.c.b16 %v74, %v73
  %v83 = vpack.c.b16 %v76, %v75
  %vm90 = vcmask 883712
  %v92 = vsel %vm90, %v27, 0
  %vm94 = vcmask 1045504
  %v96 = vsel %vm94, %v83, 0
  %98 = vmatprep.subr.bf16.mxu0 0
  %99 = vmatpush1.bf16.msra.mxu0 %v77
  %100 = vmatprep.subr.bf16.mxu0 0
  %101 = vmatpush1.bf16.msra.mxu0 %v78
  %102 = vmatprep.subr.bf16.mxu0 0
  %103 = vmatpush1.bf16.msra.mxu0 %v79
  %104 = vmatprep.subr.bf16.mxu0 0
  %105 = vmatpush1.bf16.msra.mxu0 %v80
  %106 = vmatprep.subr.bf16.mxu0 0
  %107 = vmatpush1.bf16.msra.mxu0 %v81
  %108 = vmatprep.subr.bf16.mxu0 0
  %109 = vmatpush1.bf16.msra.mxu0 %v82
  %110 = vmatprep.subr.bf16.mxu0 0
  %111 = vmatpush1.bf16.msra.mxu0 %v96
  %112 = vmatprep.subr.bf16.mxu0 0
  %113 = vmatpush1.bf16.msra.mxu0 0
  %114 = vmatprep.subr.bf16.mxu0 0
  %115 = vmatpush1.bf16.msra.mxu0 0
  %116 = vmatprep.subr.bf16.mxu0 0
  %117 = vmatpush1.bf16.msra.mxu0 0
  %118 = vmatprep.subr.bf16.mxu0 0
  %119 = vmatpush1.bf16.msra.mxu0 0
  %120 = vmatprep.subr.bf16.mxu0 0
  %121 = vmatpush1.bf16.msra.mxu0 0
  %122 = vmatprep.subr.bf16.mxu0 0
  %123 = vmatpush1.bf16.msra.mxu0 0
  %124 = vmatprep.subr.bf16.mxu0 0
  %125 = vmatpush1.bf16.msra.mxu0 0
  %126 = vmatprep.subr.bf16.mxu0 0
  %127 = vmatpush1.bf16.msra.mxu0 0
  %128 = vmatprep.subr.bf16.mxu0 0
  %129 = vmatpush1.bf16.msra.mxu0 0
  %130 = vmatprep.mubr.bf16.mxu0 0
  %131 = vmatmul.mubr.bf16.gmra.mrb[0].mxu0 %v92
  %v132 = vpop.f32.mrb[0].mxu0
  %v133 = vadd.f32 %v47, %v132
  %v134 = vpop.f32.mrb[0].mxu0
  %v135 = vpop.f32.mrb[0].mxu0
  %v136 = vpop.f32.mrb[0].mxu0
  %137 = vdwg.mxu0
  %v138 = vmax.f32 %v133, 0.0
  %v139 = vpack.c.bf16 %v138, %v138
  %v140 = vld [vmem:[%s3] sm:$0xf]
  %v141 = vld [vmem:[%s3 + $0x4] sm:$0xf]
  %v142 = vld [vmem:[%s3 + $0x8] sm:$0xf]
  %v143 = vld [vmem:[%s3 + $0xc] sm:$0xf]
  %v144 = vld [vmem:[%s3 + $0x10] sm:$0xf]
  %v145 = vld [vmem:[%s3 + $0x14] sm:$0xf]
  %v146 = vld [vmem:[%s3 + $0x18] sm:$0x1]
  %v147 = vld [vmem:[%s4] sm:$0x1]
  %v149 = vlaneseq
  %v150 = vshrl.u32 %v149, 7
  %v151 = vsub.s32 0, %v150
  %v152 = vrot.slane %v147, %v151
  %v161 = vunpack.c.l.b16 %v140
  %v162 = vunpack.c.l.b16 %v141
  %v163 = vunpack.c.l.b16 %v142
  %v164 = vunpack.c.l.b16 %v143
  %v165 = vunpack.c.l.b16 %v144
  %v166 = vunpack.c.l.b16 %v145
  %v167 = vunpack.c.l.b16 %v146
  %v168 = vpack.c.b16 %v162, %v161
  %v169 = vpack.c.b16 %v164, %v163
  %v170 = vpack.c.b16 %v166, %v165
  %v171 = vpack.c.b16 %v167, %v167
  %vm175 = vcmask 408576
  %v177 = vsel %vm175, %v139, 0
  %vm179 = vcmask 1040384
  %v181 = vsel %vm179, %v171, 0
  %183 = vmatprep.subr.bf16.mxu0 0
  %184 = vmatpush1.bf16.msra.mxu0 %v168
  %185 = vmatprep.subr.bf16.mxu0 0
  %186 = vmatpush1.bf16.msra.mxu0 %v169
  %187 = vmatprep.subr.bf16.mxu0 0
  %188 = vmatpush1.bf16.msra.mxu0 %v170
  %189 = vmatprep.subr.bf16.mxu0 0
  %190 = vmatpush1.bf16.msra.mxu0 %v181
  %191 = vmatprep.subr.bf16.mxu0 0
  %192 = vmatpush1.bf16.msra.mxu0 0
  %193 = vmatprep.subr.bf16.mxu0 0
  %194 = vmatpush1.bf16.msra.mxu0 0
  %195 = vmatprep.subr.bf16.mxu0 0
  %196 = vmatpush1.bf16.msra.mxu0 0
  %197 = vmatprep.subr.bf16.mxu0 0
  %198 = vmatpush1.bf16.msra.mxu0 0
  %199 = vmatprep.subr.bf16.mxu0 0
  %200 = vmatpush1.bf16.msra.mxu0 0
  %201 = vmatprep.subr.bf16.mxu0 0
  %202 = vmatpush1.bf16.msra.mxu0 0
  %203 = vmatprep.subr.bf16.mxu0 0
  %204 = vmatpush1.bf16.msra.mxu0 0
  %205 = vmatprep.subr.bf16.mxu0 0
  %206 = vmatpush1.bf16.msra.mxu0 0
  %207 = vmatprep.subr.bf16.mxu0 0
  %208 = vmatpush1.bf16.msra.mxu0 0
  %209 = vmatprep.subr.bf16.mxu0 0
  %210 = vmatpush1.bf16.msra.mxu0 0
  %211 = vmatprep.subr.bf16.mxu0 0
  %212 = vmatpush1.bf16.msra.mxu0 0
  %213 = vmatprep.subr.bf16.mxu0 0
  %214 = vmatpush1.bf16.msra.mxu0 0
  %215 = vmatprep.mubr.bf16.mxu0 0
  %216 = vmatmul.mubr.bf16.gmra.mrb[0].mxu0 %v177
  %v217 = vpop.f32.mrb[0].mxu0
  %v218 = vadd.f32 %v152, %v217
  %v219 = vpop.f32.mrb[0].mxu0
  %v220 = vpop.f32.mrb[0].mxu0
  %v221 = vpop.f32.mrb[0].mxu0
  %222 = vdwg.mxu0
  %v223 = vmax.f32 %v218, 0.0
  %v224 = vpack.c.bf16 %v223, %v223
  %v225 = vld [vmem:[%s5] sm:$0xf]
  %v226 = vld [vmem:[%s5 + $0x4] sm:$0x1]
  %v227 = vld [vmem:[%s6] sm:$0x1]
  %v229 = vlaneseq
  %v230 = vshrl.u32 %v229, 7
  %v231 = vsub.s32 0, %v230
  %v232 = vrot.slane %v227, %v231
  %v236 = vunpack.c.l.b16 %v225
  %v237 = vunpack.c.l.b16 %v226
  %v238 = vpack.c.b16 %v237, %v236
  %vm239 = vcmask 80896
  %v241 = vsel %vm239, %v224, 0
  %vm243 = vcmask 1044480
  %v245 = vsel %vm243, %v238, 0
  %247 = vmatprep.subr.bf16.mxu0 0
  %248 = vmatpush1.bf16.msra.mxu0 %v245
  %249 = vmatprep.subr.bf16.mxu0 0
  %250 = vmatpush1.bf16.msra.mxu0 0
  %251 = vmatprep.subr.bf16.mxu0 0
  %252 = vmatpush1.bf16.msra.mxu0 0
  %253 = vmatprep.subr.bf16.mxu0 0
  %254 = vmatpush1.bf16.msra.mxu0 0
  %255 = vmatprep.subr.bf16.mxu0 0
  %256 = vmatpush1.bf16.msra.mxu0 0
  %257 = vmatprep.subr.bf16.mxu0 0
  %258 = vmatpush1.bf16.msra.mxu0 0
  %259 = vmatprep.subr.bf16.mxu0 0
  %260 = vmatpush1.bf16.msra.mxu0 0
  %261 = vmatprep.subr.bf16.mxu0 0
  %262 = vmatpush1.bf16.msra.mxu0 0
  %263 = vmatprep.subr.bf16.mxu0 0
  %264 = vmatpush1.bf16.msra.mxu0 0
  %265 = vmatprep.subr.bf16.mxu0 0
  %266 = vmatpush1.bf16.msra.mxu0 0
  %267 = vmatprep.subr.bf16.mxu0 0
  %268 = vmatpush1.bf16.msra.mxu0 0
  %269 = vmatprep.subr.bf16.mxu0 0
  %270 = vmatpush1.bf16.msra.mxu0 0
  %271 = vmatprep.subr.bf16.mxu0 0
  %272 = vmatpush1.bf16.msra.mxu0 0
  %273 = vmatprep.subr.bf16.mxu0 0
  %274 = vmatpush1.bf16.msra.mxu0 0
  %275 = vmatprep.subr.bf16.mxu0 0
  %276 = vmatpush1.bf16.msra.mxu0 0
  %277 = vmatprep.subr.bf16.mxu0 0
  %278 = vmatpush1.bf16.msra.mxu0 0
  %279 = vmatprep.mubr.bf16.mxu0 0
  %280 = vmatmul.mubr.bf16.gmra.mrb[0].mxu0 %v241
  %v281 = vpop.f32.mrb[0].mxu0
  %v282 = vadd.f32 %v232, %v281
  %v283 = vpop.f32.mrb[0].mxu0
  %v284 = vpop.f32.mrb[0].mxu0
  %v285 = vpop.f32.mrb[0].mxu0
  %286 = vdwg.mxu0
  %v287 = vpack.c.bf16 %v282, %v282
  %vm288 = vcmask 11264
  %289 = vst.msk [vmem:[%s7] sm:$0xf] %vm288, %v287
  // Predicated region
  $region30: #{tpu_custom_call.1} parent=0 // pred_check
    _
  $region31: #{tpu_custom_call.1} parent=0 // pred_check_branch
    %291 = sbr.rel (0) target = $region33
  $region32: #{tpu_custom_call.1} parent=0 // pred_region
    _
  $region33: #{tpu_custom_call.1} parent=0 // pred_fallthru
    _
  // Predicated region
  $region34: #{tpu_custom_call.1} parent=0 // pred_check
    _
  $region35: #{tpu_custom_call.1} parent=0 // pred_check_branch
    %293 = sbr.rel (0) target = $region37
  $region36: #{tpu_custom_call.1} parent=0 // pred_region
    _
  $region37: #{tpu_custom_call.1} parent=0 // pred_fallthru
    _

</llo_original>
